<compile_context>
chip_gen: v7x
topology: tpu7x:2x2x1
jax: 0.10.0
libtpu: 0.0.40
codegen_flags: <defaults>
</compile_context>

<pallas_src>
import numpy as np
import jax
import jax.numpy as jnp
from jax.experimental import pallas as pl
from jax.experimental.pallas import tpu as pltpu

LANES = 128
SUBLANES = 8
# 1024 rows x 128 lanes x 4 B = 512 KiB per f32 input block; x2 inputs x2
# pipeline buffers = 2 MiB VMEM -> safe on v5e (16 MiB scoped) and v7x (64 MiB).
TILE_ROWS = 1024


def _make_partial_sse_kernel(tm, n_rows_valid):
    """Kernel: one row-tile per grid step; writes that tile's partial SSE.

    No cross-step accumulation -> the grid axis can be 'parallel' (megacore on
    v7x splits the row range across both TensorCores; no-op on v5e/v6e).
    """

    def kernel(x_ref, tgt_ref, out_ref):
        i = pl.program_id(0)
        # Cast in-kernel (keeps HBM traffic at the native input width).
        d = x_ref[...].astype(jnp.float32) - tgt_ref[...].astype(jnp.float32)
        dd = d * d
        # Mask rows of the last (partial) grid block that fall past the array.
        row = i * tm + jax.lax.broadcasted_iota(jnp.int32, dd.shape, 0)
        dd = jnp.where(row < n_rows_valid, dd, 0.0)
        # Fold sublane groups with cheap VPU adds, then one small XLU reduce.
        folded = jnp.sum(dd.reshape(tm // SUBLANES, SUBLANES, LANES), axis=0)
        out_ref[0, 0] = jnp.sum(folded)

    return kernel


@jax.jit
def _mse_pallas(x, x_target):
    """Mean squared error over all elements, computed on TPU via Pallas."""
    assert x.shape == x_target.shape, "x and x_target must have the same shape"
    n_elems = int(x.size)

    xf = jnp.ravel(x)
    tf = jnp.ravel(x_target)

    # Rows of real data; allocate at least 8 rows so the (8,128) block rule is
    # trivially satisfied even for tiny tensors.
    n_rows = -(-n_elems // LANES)
    n_rows_alloc = max(n_rows, SUBLANES)
    pad = n_rows_alloc * LANES - n_elems
    if pad:
        # Only taken when the flat size is not a multiple of 128 (rare for NN
        # state tensors).  Zero padding in BOTH operands contributes 0 to SSE.
        xf = jnp.pad(xf, (0, pad))
        tf = jnp.pad(tf, (0, pad))
    xf = xf.reshape(n_rows_alloc, LANES)  # metadata-only when pad == 0
    tf = tf.reshape(n_rows_alloc, LANES)

    # Row tile: multiple of 8, never larger than the array's row count.
    tm = min(TILE_ROWS, (n_rows_alloc // SUBLANES) * SUBLANES)
    num_blocks = -(-n_rows_alloc // tm)

    kernel = _make_partial_sse_kernel(tm, n_rows_alloc)

    partials = pl.pallas_call(
        kernel,
        out_shape=jax.ShapeDtypeStruct((num_blocks, 1), jnp.float32),
        grid_spec=pltpu.PrefetchScalarGridSpec(
            num_scalar_prefetch=0,
            grid=(num_blocks,),
            in_specs=[
                pl.BlockSpec((tm, LANES), lambda i: (i, 0)),
                pl.BlockSpec((tm, LANES), lambda i: (i, 0)),
            ],
            out_specs=pl.BlockSpec(
                (1, 1), lambda i: (i, 0), memory_space=pltpu.SMEM
            ),
        ),
        compiler_params=pltpu.CompilerParams(
            # Each block writes its own partial -> safe to parallelize (2 TCs
            # on v7x); harmless on single-TC v5e/v6e.
            dimension_semantics=("parallel",),
        ),
    )(xf, tf)

    # Tiny final reduction + mean normalization; fused under jit.
    return jnp.sum(partials) * jnp.float32(1.0 / n_elems)


class FinalStepMSE:
    """JAX/Pallas port of nnc.helpers.torch_utils.losses.FinalStepMSE."""

    def __init__(self, x_target, total_time):
        self.x_target = x_target
        self.total_time = total_time

    def __call__(self, t, x):
        # Host-side time check, mirroring the torch module (t -> numpy).
        # TODO(synk): this device_get on t is a host sync, kept for parity with
        # the torch semantics (which return Python None when t != total_time).
        t_np = np.asarray(jax.device_get(t) if isinstance(t, jax.Array) else t)
        if np.allclose(t_np - self.total_time, 0):
            return _mse_pallas(x, self.x_target)
        else:
            return None


if __name__ == "__main__":
    key = jax.random.PRNGKey(0)
    k1, k2, k3, k4 = jax.random.split(key, 4)

    # Small NCHW state tensors: batch=2, channels=4, spatial=16x16.
    x_shape = (2, 4, 16, 16)
    x_target = jax.random.normal(k1, x_shape, dtype=jnp.float32)
    x = jax.random.normal(k2, x_shape, dtype=jnp.float32)
    total_time = 5.0

    loss_fn = FinalStepMSE(x_target, total_time)

    # Case 1: t != total_time -> None
    out_none = loss_fn(jnp.array(3.0), x)
    assert out_none is None

    # Case 2: t == total_time -> MSE
    loss = loss_fn(jnp.array(total_time), x)
    loss = jax.block_until_ready(loss)
    ref = jnp.mean((x - x_target) ** 2)
    np.testing.assert_allclose(np.asarray(loss), np.asarray(ref), rtol=1e-6, atol=1e-6)

    # Case 3: awkward shape (flat size not a multiple of 128) -> exercises the
    # pad + partial-last-block masking path.
    odd_shape = (3, 5, 7, 11)  # 1155 elements
    xo = jax.random.normal(k3, odd_shape, dtype=jnp.float32)
    to = jax.random.normal(k4, odd_shape, dtype=jnp.float32)
    loss_odd = jax.block_until_ready(_mse_pallas(xo, to))
    ref_odd = jnp.mean((xo - to) ** 2)
    np.testing.assert_allclose(
        np.asarray(loss_odd), np.asarray(ref_odd), rtol=1e-6, atol=1e-6
    )

    # Case 4: bf16 state tensors -> in-kernel cast, no wrapper upcast.
    xb = x.astype(jnp.bfloat16)
    tb = x_target.astype(jnp.bfloat16)
    loss_bf16 = jax.block_until_ready(_mse_pallas(xb, tb))
    ref_bf16 = jnp.mean(
        (xb.astype(jnp.float32) - tb.astype(jnp.float32)) ** 2
    )
    np.testing.assert_allclose(
        np.asarray(loss_bf16), np.asarray(ref_bf16), rtol=1e-5, atol=1e-6
    )

    print("KERNEL_OK")
</pallas_src>

<mosaic_0001>
module attributes {stable_mosaic.version = 11 : i64} {
  func.func @kernel(%arg0: i32, %arg1: memref<16x128xf32, #tpu.memory_space<vmem>>, %arg2: memref<16x128xf32, #tpu.memory_space<vmem>>, %arg3: memref<1x1xf32, #tpu.memory_space<smem>>) attributes {dimension_semantics = [#tpu.dimension_semantics<parallel>], iteration_bounds = array<i64: 1>, scalar_prefetch = 0 : i64, scratch_operands = 0 : i64, tpu.core_type = #tpu.core_type<tc>, window_params = [{transform_indices = @transform_0, window_bounds = array<i64: 16, 128>}, {transform_indices = @transform_1, window_bounds = array<i64: 16, 128>}, {transform_indices = @transform_2, window_bounds = array<i64: 1, 1>}]} {
    %c0 = arith.constant 0 : index
    %c0_0 = arith.constant 0 : index
    %0 = vector.load %arg1[%c0, %c0_0] : memref<16x128xf32, #tpu.memory_space<vmem>>, vector<16x128xf32>
    %c0_1 = arith.constant 0 : index
    %c0_2 = arith.constant 0 : index
    %1 = vector.load %arg2[%c0_1, %c0_2] : memref<16x128xf32, #tpu.memory_space<vmem>>, vector<16x128xf32>
    %2 = arith.subf %0, %1 : vector<16x128xf32>
    %3 = arith.mulf %2, %2 : vector<16x128xf32>
    %c16_i32 = arith.constant 16 : i32
    %4 = arith.muli %arg0, %c16_i32 : i32
    %5 = tpu.iota {dimensions = array<i32: 0>} : vector<16x128xi32>
    %6 = vector.broadcast %4 : i32 to vector<16x128xi32>
    %7 = arith.addi %6, %5 : vector<16x128xi32>
    %c16_i32_3 = arith.constant 16 : i32
    %8 = vector.broadcast %c16_i32_3 : i32 to vector<16x128xi32>
    %9 = arith.cmpi slt, %7, %8 : vector<16x128xi32>
    %cst = arith.constant 0.000000e+00 : f32
    %10 = vector.broadcast %cst : f32 to vector<16x128xf32>
    %11 = arith.select %9, %3, %10 : vector<16x128xi1>, vector<16x128xf32>
    %12 = vector.shape_cast %11 : vector<16x128xf32> to vector<2x8x128xf32>
    %cst_4 = arith.constant dense<0.000000e+00> : vector<8x128xf32>
    %13 = vector.multi_reduction <add>, %12, %cst_4 [0] : vector<2x8x128xf32> to vector<8x128xf32>
    %14 = vector.shape_cast %13 : vector<8x128xf32> to vector<1x8x128xf32>
    %cst_5 = arith.constant dense<0.000000e+00> : vector<1xf32>
    %15 = vector.multi_reduction <add>, %14, %cst_5 [1, 2] : vector<1x8x128xf32> to vector<1xf32>
    %16 = vector.shape_cast %15 : vector<1xf32> to vector<1x1x1xf32>
    %17 = vector.extract %16[0, 0, 0] : f32 from vector<1x1x1xf32>
    %c0_6 = arith.constant 0 : index
    %c0_7 = arith.constant 0 : index
    %18 = memref.load %arg3[%c0_6, %c0_7] : memref<1x1xf32, #tpu.memory_space<smem>>
    memref.store %17, %arg3[%c0_6, %c0_7] : memref<1x1xf32, #tpu.memory_space<smem>>
    return
  }
  func.func @transform_0(%arg0: i32) -> (i32, i32) {
    %c0_i32 = arith.constant 0 : i32
    %c0_i32_0 = arith.constant 0 : i32
    return %arg0, %c0_i32 : i32, i32
  }
  func.func @transform_1(%arg0: i32) -> (i32, i32) {
    %c0_i32 = arith.constant 0 : i32
    %c0_i32_0 = arith.constant 0 : i32
    return %arg0, %c0_i32 : i32, i32
  }
  func.func @transform_2(%arg0: i32) -> (i32, i32) {
    %c0_i32 = arith.constant 0 : i32
    %c0_i32_0 = arith.constant 0 : i32
    return %arg0, %c0_i32 : i32, i32
  }
}

</mosaic_0001>

<llo_original>
// kernel: _mse_pallas.1
$region0: #{_mse_pallas.1}
  #allocation0 [shape = 'u32[]', space=smem, size = 0x4, offset = 0x4, fixed_abs, tag = 'smem constant byte address 0x4 - core index']
  #allocation1 [shape = 'u32[144,128]{1,0:T(1,128)}', space=vmem, size = 0x12000, scoped, tag = 'internal scratch']
  %s0 = inlined_call_operand.vmem [shape: f32[16,128], index: 0, kind: input, shape index: {}]
  %s1 = inlined_call_operand.vmem [shape: f32[16,128], index: 1, kind: input, shape index: {}]
  %s2 = inlined_call_operand.hbm [shape: f32[1,1], index: 2, kind: output, shape index: {}]
  %s3 = sld [smem:[#allocation0]]
  $region18: #{_mse_pallas.1} parent=0
    _
  %s5 = ssub.s32 1, %s3
  %s6 = scalar_select 0, %s5, %s3
  $region1: #{_mse_pallas.1} parent=0
    #allocation2 [shape = 'u8[512]{0}', space=smem, size = 0x200, scoped, tag = 'output window, operand 0, single buffered']
    #allocation3 [shape = 's32[1]{0}', space=sflag, size = 0x4, scoped, tag = 'scoped memory for _mse_pallas.1']
    %7 = vsyncpa [#allocation3], 0
    // Predicated region
    $region2: #{_mse_pallas.1} parent=1 // pred_check
      _
    $region3: #{_mse_pallas.1} parent=1 // pred_check_branch
      %9 = sbr.rel (0) target = $region5
    $region4: #{_mse_pallas.1} parent=1 // pred_region
      _
    $region5: #{_mse_pallas.1} parent=1 // pred_fallthru
      _
    // Predicated region
    $region6: #{_mse_pallas.1} parent=1 // pred_check
      _
    $region7: #{_mse_pallas.1} parent=1 // pred_check_branch
      %11 = sbr.rel (0) target = $region9
    $region8: #{_mse_pallas.1} parent=1 // pred_region
      _
    $region9: #{_mse_pallas.1} parent=1 // pred_fallthru
      _
    %v12 = vld [vmem:[%s0] sm:$0xff]
    %v13 = vld [vmem:[%s0 + $0x8] sm:$0xff]
    %v14 = vld [vmem:[%s1] sm:$0xff]
    %v15 = vld [vmem:[%s1 + $0x8] sm:$0xff]
    %v16 = vsub.f32 %v12, %v14
    %v17 = vsub.f32 %v13, %v15
    %v18 = vmul.f32 %v16, %v16
    %v19 = vmul.f32 %v17, %v17
    %s20 = smul.u32 0, 16
    %v21 = vlaneseq
    %v22 = vshrl.u32 %v21, 7
    %v23 = vadd.s32 %v22, 8
    %v24 = vstv %s20
    %v25 = vadd.s32 %v24, %v22
    %v26 = vadd.s32 %v24, %v23
    %vm27 = vcmp.lt.s32.totalorder %v25, 16
    %vm28 = vcmp.lt.s32.totalorder %v26, 16
    %v29 = vsel %vm27, %v18, 0.0
    %v30 = vsel %vm28, %v19, 0.0
    %v31 = vadd.f32 %v29, %v30
    %32 = vadd.xlane.f32.xlu0 %v31
    %v33 = vpop.xlane.xlu0 %32
    %v34 = vrot.slane %v33, 4
    %v35 = vadd.f32 %v33, %v34
    %v36 = vrot.slane %v35, 2
    %v37 = vadd.f32 %v35, %v36
    %v38 = vrot.slane %v37, 1
    %v39 = vadd.f32 %v37, %v38
    %s40 = vtos %v39
    %s41 = scalar_lea.smem [#allocation2], 0
    %42 = sst [smem:[%s41]] %s40
    // Predicated region
    $region10: #{_mse_pallas.1} parent=1 // pred_check
      _
    $region11: #{_mse_pallas.1} parent=1 // pred_check_branch
      %44 = sbr.rel (0) target = $region13
    $region12: #{_mse_pallas.1} parent=1 // pred_region
      %s46 = ssub.s32 16, 16
      %47 = vsyncadd [#allocation3], %s46
      %50 = dma.smem_to_hbm [#allocation2], 16, %s2, [#allocation3]
    $region13: #{_mse_pallas.1} parent=1 // pred_fallthru
      _
    // Predicated region
    $region14: #{_mse_pallas.1} parent=1 // pred_check
      _
    $region15: #{_mse_pallas.1} parent=1 // pred_check_branch
      %52 = sbr.rel (0) target = $region17
    $region16: #{_mse_pallas.1} parent=1 // pred_region
      %53 = dma.done [#allocation3], 16
    $region17: #{_mse_pallas.1} parent=1 // pred_fallthru
      _
    %54 = sfence
    %55 = vsyncpa [#allocation3], 1

</llo_original>
